<compile_context>
chip_gen: v5e
topology: v5e:2x2
jax: 0.10.0
libtpu: 0.0.40
codegen_flags: <defaults>
</compile_context>

<pallas_src>
import jax
import jax.numpy as jnp
from jax import lax
from jax.experimental import pallas as pl
from jax.experimental.pallas import tpu as pltpu

NEG_SLOPE = 0.01
D_IN, D_H1, D_H2, D_H3 = 28 * 28, 128, 64, 16

# Default batch tile: big enough to fill the MXU M dimension and amortize the
# per-grid-step overhead, small enough (x+out ~1.75 MiB each, double-buffered,
# + ~0.9 MiB resident weights) to fit the 32 MiB scoped-VMEM default on every
# generation, including v7x's 64 MiB physical VMEM.
DEFAULT_TB = 512


def _round_up(n, m):
    return ((n + m - 1) // m) * m


def _leaky_relu(v):
    return jnp.where(v >= 0, v, NEG_SLOPE * v)


def _lmser_kernel(x_ref, w1_ref, w2_ref, w3c_ref, o_ref):
    x = x_ref[...]
    w1 = w1_ref[...]
    w2 = w2_ref[...]
    w3c = w3c_ref[...]

    # Encoder: contract activation lanes against the weight's in_features axis
    # (axis 1), i.e. x @ W^T, without materializing a transpose.
    dn_t = (((1,), (1,)), ((), ()))
    h1 = _leaky_relu(lax.dot_general(x, w1, dn_t, preferred_element_type=jnp.float32))
    h2 = _leaky_relu(lax.dot_general(h1, w2, dn_t, preferred_element_type=jnp.float32))

    # Fused W3 pair: (h2 @ W3^T) @ W3 == h2 @ (W3^T @ W3) == h2 @ W3c  (64x64).
    d3 = _leaky_relu(jnp.dot(h2, w3c, preferred_element_type=jnp.float32))

    # Decoder: contract against the weight's out_features axis (x @ W).
    d2 = _leaky_relu(jnp.dot(d3, w2, preferred_element_type=jnp.float32))
    o_ref[...] = jnp.dot(d2, w1, preferred_element_type=jnp.float32)


def lmser_forward(x, w1, w2, w3, *, tb=DEFAULT_TB):
    """x: (B, 784) f32; w1: (128, 784); w2: (64, 128); w3: (16, 64)."""
    B = x.shape[0]

    # Fuse the two W3 matmuls into a single resident 64x64 weight.
    w3c = jnp.dot(w3.T, w3, preferred_element_type=jnp.float32)

    # Choose the batch tile and pad B to a multiple of it (no in-kernel mask).
    TB = _round_up(min(tb, _round_up(B, 8)), 8)
    Bp = _round_up(B, TB)
    if Bp != B:
        x = jnp.pad(x, ((0, Bp - B), (0, 0)))
    grid = (Bp // TB,)

    flops_per_row = 2 * (2 * D_IN * D_H1 + 2 * D_H1 * D_H2 + D_H2 * D_H2)
    weight_bytes = 4 * (D_H1 * D_IN + D_H2 * D_H1 + D_H2 * D_H2)

    out = pl.pallas_call(
        _lmser_kernel,
        out_shape=jax.ShapeDtypeStruct((Bp, D_IN), jnp.float32),
        grid_spec=pl.GridSpec(
            grid=grid,
            in_specs=[
                # Streamed batch tiles.
                pl.BlockSpec((TB, D_IN), lambda i: (i, 0)),
                # Weights: same block every step -> stay resident in VMEM.
                pl.BlockSpec((D_H1, D_IN), lambda i: (0, 0)),
                pl.BlockSpec((D_H2, D_H1), lambda i: (0, 0)),
                pl.BlockSpec((D_H2, D_H2), lambda i: (0, 0)),
            ],
            out_specs=pl.BlockSpec((TB, D_IN), lambda i: (i, 0)),
        ),
        compiler_params=pltpu.CompilerParams(
            dimension_semantics=("parallel",),
        ),
        cost_estimate=pl.CostEstimate(
            flops=Bp * flops_per_row,
            transcendentals=0,
            bytes_accessed=2 * Bp * D_IN * 4 + weight_bytes,
        ),
    )(x, w1, w2, w3c)

    return out[:B] if Bp != B else out


def lmser_reference(x, w1, w2, w3):
    h = _leaky_relu(x @ w1.T)
    h = _leaky_relu(h @ w2.T)
    h = h @ w3.T
    d = _leaky_relu(h @ w3)
    d = _leaky_relu(d @ w2)
    return d @ w1


if __name__ == "__main__":
    key = jax.random.PRNGKey(0)
    kx, k1, k2, k3 = jax.random.split(key, 4)

    # Deterministic synthetic weights (uniform, roughly Kaiming-scaled).
    w1 = jax.random.uniform(k1, (D_H1, D_IN), jnp.float32, -1.0, 1.0) / jnp.sqrt(D_IN)
    w2 = jax.random.uniform(k2, (D_H2, D_H1), jnp.float32, -1.0, 1.0) / jnp.sqrt(D_H1)
    w3 = jax.random.uniform(k3, (D_H3, D_H2), jnp.float32, -1.0, 1.0) / jnp.sqrt(D_H2)

    # Small default test case (single tile).
    B = 8
    x = jax.random.normal(kx, (B, D_IN), dtype=jnp.float32)
    out = jax.block_until_ready(lmser_forward(x, w1, w2, w3))
    ref = lmser_reference(x, w1, w2, w3)
    assert out.shape == (B, D_IN)
    assert jnp.allclose(out, ref, atol=1e-4, rtol=1e-4), "mismatch vs reference (B=8)"

    # Exercise the multi-tile + tail-padding path with a tiny tile size.
    B2 = 20
    x2 = jax.random.normal(kx, (B2, D_IN), dtype=jnp.float32)
    out2 = jax.block_until_ready(lmser_forward(x2, w1, w2, w3, tb=8))
    ref2 = lmser_reference(x2, w1, w2, w3)
    assert out2.shape == (B2, D_IN)
    assert jnp.allclose(out2, ref2, atol=1e-4, rtol=1e-4), "mismatch vs reference (B=20, tiled)"

    print("KERNEL_OK")
</pallas_src>

<mosaic_0001>
module attributes {stable_mosaic.version = 11 : i64} {
  func.func @_lmser_kernel(%arg0: i32, %arg1: memref<8x784xf32, #tpu.memory_space<vmem>>, %arg2: memref<128x784xf32, #tpu.memory_space<vmem>>, %arg3: memref<64x128xf32, #tpu.memory_space<vmem>>, %arg4: memref<64x64xf32, #tpu.memory_space<vmem>>, %arg5: memref<8x784xf32, #tpu.memory_space<vmem>>) attributes {dimension_semantics = [#tpu.dimension_semantics<parallel>], iteration_bounds = array<i64: 1>, scalar_prefetch = 0 : i64, scratch_operands = 0 : i64, tpu.core_type = #tpu.core_type<tc>, window_params = [{transform_indices = @transform_0, window_bounds = array<i64: 8, 784>}, {pipeline_mode = #tpu.pipeline_mode<synchronous>, transform_indices = @transform_1, window_bounds = array<i64: 128, 784>}, {pipeline_mode = #tpu.pipeline_mode<synchronous>, transform_indices = @transform_2, window_bounds = array<i64: 64, 128>}, {pipeline_mode = #tpu.pipeline_mode<synchronous>, transform_indices = @transform_3, window_bounds = array<i64: 64, 64>}, {transform_indices = @transform_4, window_bounds = array<i64: 8, 784>}]} {
    %c0 = arith.constant 0 : index
    %c0_0 = arith.constant 0 : index
    %0 = vector.load %arg1[%c0, %c0_0] : memref<8x784xf32, #tpu.memory_space<vmem>>, vector<8x784xf32>
    %c0_1 = arith.constant 0 : index
    %c0_2 = arith.constant 0 : index
    %1 = vector.load %arg2[%c0_1, %c0_2] : memref<128x784xf32, #tpu.memory_space<vmem>>, vector<128x784xf32>
    %c0_3 = arith.constant 0 : index
    %c0_4 = arith.constant 0 : index
    %2 = vector.load %arg3[%c0_3, %c0_4] : memref<64x128xf32, #tpu.memory_space<vmem>>, vector<64x128xf32>
    %c0_5 = arith.constant 0 : index
    %c0_6 = arith.constant 0 : index
    %3 = vector.load %arg4[%c0_5, %c0_6] : memref<64x64xf32, #tpu.memory_space<vmem>>, vector<64x64xf32>
    %cst = arith.constant dense<0.000000e+00> : vector<8x128xf32>
    %4 = tpu.matmul %0, %1, %cst {dimension_numbers = #tpu.dot_dimension_numbers<[1], [1], [0], [0], [0, 0, 1, 0], [], []>} : vector<8x784xf32>, vector<128x784xf32>, vector<8x128xf32> -> vector<8x128xf32>
    %cst_7 = arith.constant 0.000000e+00 : f32
    %5 = vector.broadcast %cst_7 : f32 to vector<8x128xf32>
    %6 = arith.cmpf oge, %4, %5 : vector<8x128xf32>
    %cst_8 = arith.constant 0.00999999977 : f32
    %7 = vector.broadcast %cst_8 : f32 to vector<8x128xf32>
    %8 = arith.mulf %7, %4 : vector<8x128xf32>
    %9 = arith.select %6, %4, %8 : vector<8x128xi1>, vector<8x128xf32>
    %cst_9 = arith.constant dense<0.000000e+00> : vector<8x64xf32>
    %10 = tpu.matmul %9, %2, %cst_9 {dimension_numbers = #tpu.dot_dimension_numbers<[1], [1], [0], [0], [0, 0, 1, 0], [], []>} : vector<8x128xf32>, vector<64x128xf32>, vector<8x64xf32> -> vector<8x64xf32>
    %cst_10 = arith.constant 0.000000e+00 : f32
    %11 = vector.broadcast %cst_10 : f32 to vector<8x64xf32>
    %12 = arith.cmpf oge, %10, %11 : vector<8x64xf32>
    %cst_11 = arith.constant 0.00999999977 : f32
    %13 = vector.broadcast %cst_11 : f32 to vector<8x64xf32>
    %14 = arith.mulf %13, %10 : vector<8x64xf32>
    %15 = arith.select %12, %10, %14 : vector<8x64xi1>, vector<8x64xf32>
    %cst_12 = arith.constant dense<0.000000e+00> : vector<8x64xf32>
    %16 = tpu.matmul %15, %3, %cst_12 {dimension_numbers = #tpu.dot_dimension_numbers<[1], [0], [0], [1], [0, 0, 1, 1], [], []>} : vector<8x64xf32>, vector<64x64xf32>, vector<8x64xf32> -> vector<8x64xf32>
    %cst_13 = arith.constant 0.000000e+00 : f32
    %17 = vector.broadcast %cst_13 : f32 to vector<8x64xf32>
    %18 = arith.cmpf oge, %16, %17 : vector<8x64xf32>
    %cst_14 = arith.constant 0.00999999977 : f32
    %19 = vector.broadcast %cst_14 : f32 to vector<8x64xf32>
    %20 = arith.mulf %19, %16 : vector<8x64xf32>
    %21 = arith.select %18, %16, %20 : vector<8x64xi1>, vector<8x64xf32>
    %cst_15 = arith.constant dense<0.000000e+00> : vector<8x128xf32>
    %22 = tpu.matmul %21, %2, %cst_15 {dimension_numbers = #tpu.dot_dimension_numbers<[1], [0], [0], [1], [0, 0, 1, 1], [], []>} : vector<8x64xf32>, vector<64x128xf32>, vector<8x128xf32> -> vector<8x128xf32>
    %cst_16 = arith.constant 0.000000e+00 : f32
    %23 = vector.broadcast %cst_16 : f32 to vector<8x128xf32>
    %24 = arith.cmpf oge, %22, %23 : vector<8x128xf32>
    %cst_17 = arith.constant 0.00999999977 : f32
    %25 = vector.broadcast %cst_17 : f32 to vector<8x128xf32>
    %26 = arith.mulf %25, %22 : vector<8x128xf32>
    %27 = arith.select %24, %22, %26 : vector<8x128xi1>, vector<8x128xf32>
    %cst_18 = arith.constant dense<0.000000e+00> : vector<8x784xf32>
    %28 = tpu.matmul %27, %1, %cst_18 {dimension_numbers = #tpu.dot_dimension_numbers<[1], [0], [0], [1], [0, 0, 1, 1], [], []>} : vector<8x128xf32>, vector<128x784xf32>, vector<8x784xf32> -> vector<8x784xf32>
    %c0_19 = arith.constant 0 : index
    %c0_20 = arith.constant 0 : index
    %29 = vector.load %arg5[%c0_19, %c0_20] : memref<8x784xf32, #tpu.memory_space<vmem>>, vector<8x784xf32>
    tpu.vector_store %arg5[%c0_19, %c0_20], %28 {strides = array<i32>} : memref<8x784xf32, #tpu.memory_space<vmem>>, vector<8x784xf32>,
    return
  }
  func.func @transform_0(%arg0: i32) -> (i32, i32) {
    %c0_i32 = arith.constant 0 : i32
    %c0_i32_0 = arith.constant 0 : i32
    return %arg0, %c0_i32 : i32, i32
  }
  func.func @transform_1(%arg0: i32) -> (i32, i32) {
    %c0_i32 = arith.constant 0 : i32
    %c0_i32_0 = arith.constant 0 : i32
    %c0_i32_1 = arith.constant 0 : i32
    return %c0_i32, %c0_i32_0 : i32, i32
  }
  func.func @transform_2(%arg0: i32) -> (i32, i32) {
    %c0_i32 = arith.constant 0 : i32
    %c0_i32_0 = arith.constant 0 : i32
    %c0_i32_1 = arith.constant 0 : i32
    return %c0_i32, %c0_i32_0 : i32, i32
  }
  func.func @transform_3(%arg0: i32) -> (i32, i32) {
    %c0_i32 = arith.constant 0 : i32
    %c0_i32_0 = arith.constant 0 : i32
    %c0_i32_1 = arith.constant 0 : i32
    return %c0_i32, %c0_i32_0 : i32, i32
  }
  func.func @transform_4(%arg0: i32) -> (i32, i32) {
    %c0_i32 = arith.constant 0 : i32
    %c0_i32_0 = arith.constant 0 : i32
    return %arg0, %c0_i32 : i32, i32
  }
}

</mosaic_0001>

<llo_original>
// kernel: tpu_custom_call.1
$region0: #{tpu_custom_call.1}
  #allocation0 [shape = 'u32[]', space=smem, size = 0x4, offset = 0x4, fixed_abs, tag = 'smem constant byte address 0x4 - core index']
  #allocation1 [shape = 'u32[72,128]{1,0:T(1,128)}', space=vmem, size = 0x9000, scoped, tag = 'internal scratch']
  %s0 = inlined_call_operand.vmem [shape: f32[8,784], index: 0, kind: input, shape index: {}]
  %s1 = inlined_call_operand.vmem [shape: f32[128,784], index: 1, kind: input, shape index: {}]
  %s2 = inlined_call_operand.vmem [shape: f32[64,128], index: 2, kind: input, shape index: {}]
  %s3 = inlined_call_operand.vmem [shape: f32[64,64], index: 3, kind: input, shape index: {}]
  %s4 = inlined_call_operand.hbm [shape: f32[8,784], index: 4, kind: output, shape index: {}]
  %s5 = sld [smem:[#allocation0]]
  $region26: #{tpu_custom_call.1} parent=0
    _
  %s7 = ssub.s32 1, %s5
  %s8 = scalar_select 0, %s7, %s5
  $region1: #{tpu_custom_call.1} parent=0
    #allocation2 [shape = 'u8[28672]{0}', space=vmem, size = 0x7000, scoped, tag = 'output window, operand 0, single buffered']
    #allocation3 [shape = 's32[1]{0}', space=sflag, size = 0x4, scoped, tag = 'scoped memory for tpu_custom_call.1']
    %9 = vsyncpa [#allocation3], 0
    // Predicated region
    $region2: #{tpu_custom_call.1} parent=1 // pred_check
      _
    $region3: #{tpu_custom_call.1} parent=1 // pred_check_branch
      %11 = sbr.rel (0) target = $region5
    $region4: #{tpu_custom_call.1} parent=1 // pred_region
      _
    $region5: #{tpu_custom_call.1} parent=1 // pred_fallthru
      _
    // Predicated region
    $region6: #{tpu_custom_call.1} parent=1 // pred_check
      _
    $region7: #{tpu_custom_call.1} parent=1 // pred_check_branch
      %13 = sbr.rel (0) target = $region9
    $region8: #{tpu_custom_call.1} parent=1 // pred_region
      _
    $region9: #{tpu_custom_call.1} parent=1 // pred_fallthru
      _
    // Predicated region
    $region10: #{tpu_custom_call.1} parent=1 // pred_check
      _
    $region11: #{tpu_custom_call.1} parent=1 // pred_check_branch
      %15 = sbr.rel (0) target = $region13
    $region12: #{tpu_custom_call.1} parent=1 // pred_region
      _
    $region13: #{tpu_custom_call.1} parent=1 // pred_fallthru
      _
    // Predicated region
    $region14: #{tpu_custom_call.1} parent=1 // pred_check
      _
    $region15: #{tpu_custom_call.1} parent=1 // pred_check_branch
      %17 = sbr.rel (0) target = $region17
    $region16: #{tpu_custom_call.1} parent=1 // pred_region
      _
    $region17: #{tpu_custom_call.1} parent=1 // pred_fallthru
      _
    %v18 = vld [vmem:[%s0] sm:$0xff]
    %v19 = vld [vmem:[%s0 + $0x8] sm:$0xff]
    %v20 = vld [vmem:[%s0 + $0x10] sm:$0xff]
    %v21 = vld [vmem:[%s0 + $0x18] sm:$0xff]
    %v22 = vld [vmem:[%s0 + $0x20] sm:$0xff]
    %v23 = vld [vmem:[%s0 + $0x28] sm:$0xff]
    %v24 = vld [vmem:[%s0 + $0x30] sm:$0xff]
    %v25 = vld [vmem:[%s1] sm:$0xff]
    %v26 = vld [vmem:[%s1 + $0x8] sm:$0xff]
    %v27 = vld [vmem:[%s1 + $0x10] sm:$0xff]
    %v28 = vld [vmem:[%s1 + $0x18] sm:$0xff]
    %v29 = vld [vmem:[%s1 + $0x20] sm:$0xff]
    %v30 = vld [vmem:[%s1 + $0x28] sm:$0xff]
    %v31 = vld [vmem:[%s1 + $0x30] sm:$0xff]
    %v32 = vld [vmem:[%s1 + $0x38] sm:$0xff]
    %v33 = vld [vmem:[%s1 + $0x40] sm:$0xff]
    %v34 = vld [vmem:[%s1 + $0x48] sm:$0xff]
    %v35 = vld [vmem:[%s1 + $0x50] sm:$0xff]
    %v36 = vld [vmem:[%s1 + $0x58] sm:$0xff]
    %v37 = vld [vmem:[%s1 + $0x60] sm:$0xff]
    %v38 = vld [vmem:[%s1 + $0x68] sm:$0xff]
    %v39 = vld [vmem:[%s1 + $0x70] sm:$0xff]
    %v40 = vld [vmem:[%s1 + $0x78] sm:$0xff]
    %v41 = vld [vmem:[%s1 + $0x80] sm:$0xff]
    %v42 = vld [vmem:[%s1 + $0x88] sm:$0xff]
    %v43 = vld [vmem:[%s1 + $0x90] sm:$0xff]
    %v44 = vld [vmem:[%s1 + $0x98] sm:$0xff]
    %v45 = vld [vmem:[%s1 + $0xa0] sm:$0xff]
    %v46 = vld [vmem:[%s1 + $0xa8] sm:$0xff]
    %v47 = vld [vmem:[%s1 + $0xb0] sm:$0xff]
    %v48 = vld [vmem:[%s1 + $0xb8] sm:$0xff]
    %v49 = vld [vmem:[%s1 + $0xc0] sm:$0xff]
    %v50 = vld [vmem:[%s1 + $0xc8] sm:$0xff]
    %v51 = vld [vmem:[%s1 + $0xd0] sm:$0xff]
    %v52 = vld [vmem:[%s1 + $0xd8] sm:$0xff]
    %v53 = vld [vmem:[%s1 + $0xe0] sm:$0xff]
    %v54 = vld [vmem:[%s1 + $0xe8] sm:$0xff]
    %v55 = vld [vmem:[%s1 + $0xf0] sm:$0xff]
    %v56 = vld [vmem:[%s1 + $0xf8] sm:$0xff]
    %v57 = vld [vmem:[%s1 + $0x100] sm:$0xff]
    %v58 = vld [vmem:[%s1 + $0x108] sm:$0xff]
    %v59 = vld [vmem:[%s1 + $0x110] sm:$0xff]
    %v60 = vld [vmem:[%s1 + $0x118] sm:$0xff]
    %v61 = vld [vmem:[%s1 + $0x120] sm:$0xff]
    %v62 = vld [vmem:[%s1 + $0x128] sm:$0xff]
    %v63 = vld [vmem:[%s1 + $0x130] sm:$0xff]
    %v64 = vld [vmem:[%s1 + $0x138] sm:$0xff]
    %v65 = vld [vmem:[%s1 + $0x140] sm:$0xff]
    %v66 = vld [vmem:[%s1 + $0x148] sm:$0xff]
    %v67 = vld [vmem:[%s1 + $0x150] sm:$0xff]
    %v68 = vld [vmem:[%s1 + $0x158] sm:$0xff]
    %v69 = vld [vmem:[%s1 + $0x160] sm:$0xff]
    %v70 = vld [vmem:[%s1 + $0x168] sm:$0xff]
    %v71 = vld [vmem:[%s1 + $0x170] sm:$0xff]
    %v72 = vld [vmem:[%s1 + $0x178] sm:$0xff]
    %v73 = vld [vmem:[%s1 + $0x180] sm:$0xff]
    %v74 = vld [vmem:[%s1 + $0x188] sm:$0xff]
    %v75 = vld [vmem:[%s1 + $0x190] sm:$0xff]
    %v76 = vld [vmem:[%s1 + $0x198] sm:$0xff]
    %v77 = vld [vmem:[%s1 + $0x1a0] sm:$0xff]
    %v78 = vld [vmem:[%s1 + $0x1a8] sm:$0xff]
    %v79 = vld [vmem:[%s1 + $0x1b0] sm:$0xff]
    %v80 = vld [vmem:[%s1 + $0x1b8] sm:$0xff]
    %v81 = vld [vmem:[%s1 + $0x1c0] sm:$0xff]
    %v82 = vld [vmem:[%s1 + $0x1c8] sm:$0xff]
    %v83 = vld [vmem:[%s1 + $0x1d0] sm:$0xff]
    %v84 = vld [vmem:[%s1 + $0x1d8] sm:$0xff]
    %v85 = vld [vmem:[%s1 + $0x1e0] sm:$0xff]
    %v86 = vld [vmem:[%s1 + $0x1e8] sm:$0xff]
    %v87 = vld [vmem:[%s1 + $0x1f0] sm:$0xff]
    %v88 = vld [vmem:[%s1 + $0x1f8] sm:$0xff]
    %v89 = vld [vmem:[%s1 + $0x200] sm:$0xff]
    %v90 = vld [vmem:[%s1 + $0x208] sm:$0xff]
    %v91 = vld [vmem:[%s1 + $0x210] sm:$0xff]
    %v92 = vld [vmem:[%s1 + $0x218] sm:$0xff]
    %v93 = vld [vmem:[%s1 + $0x220] sm:$0xff]
    %v94 = vld [vmem:[%s1 + $0x228] sm:$0xff]
    %v95 = vld [vmem:[%s1 + $0x230] sm:$0xff]
    %v96 = vld [vmem:[%s1 + $0x238] sm:$0xff]
    %v97 = vld [vmem:[%s1 + $0x240] sm:$0xff]
    %v98 = vld [vmem:[%s1 + $0x248] sm:$0xff]
    %v99 = vld [vmem:[%s1 + $0x250] sm:$0xff]
    %v100 = vld [vmem:[%s1 + $0x258] sm:$0xff]
    %v101 = vld [vmem:[%s1 + $0x260] sm:$0xff]
    %v102 = vld [vmem:[%s1 + $0x268] sm:$0xff]
    %v103 = vld [vmem:[%s1 + $0x270] sm:$0xff]
    %v104 = vld [vmem:[%s1 + $0x278] sm:$0xff]
    %v105 = vld [vmem:[%s1 + $0x280] sm:$0xff]
    %v106 = vld [vmem:[%s1 + $0x288] sm:$0xff]
    %v107 = vld [vmem:[%s1 + $0x290] sm:$0xff]
    %v108 = vld [vmem:[%s1 + $0x298] sm:$0xff]
    %v109 = vld [vmem:[%s1 + $0x2a0] sm:$0xff]
    %v110 = vld [vmem:[%s1 + $0x2a8] sm:$0xff]
    %v111 = vld [vmem:[%s1 + $0x2b0] sm:$0xff]
    %v112 = vld [vmem:[%s1 + $0x2b8] sm:$0xff]
    %v113 = vld [vmem:[%s1 + $0x2c0] sm:$0xff]
    %v114 = vld [vmem:[%s1 + $0x2c8] sm:$0xff]
    %v115 = vld [vmem:[%s1 + $0x2d0] sm:$0xff]
    %v116 = vld [vmem:[%s1 + $0x2d8] sm:$0xff]
    %v117 = vld [vmem:[%s1 + $0x2e0] sm:$0xff]
    %v118 = vld [vmem:[%s1 + $0x2e8] sm:$0xff]
    %v119 = vld [vmem:[%s1 + $0x2f0] sm:$0xff]
    %v120 = vld [vmem:[%s1 + $0x2f8] sm:$0xff]
    %v121 = vld [vmem:[%s1 + $0x300] sm:$0xff]
    %v122 = vld [vmem:[%s1 + $0x308] sm:$0xff]
    %v123 = vld [vmem:[%s1 + $0x310] sm:$0xff]
    %v124 = vld [vmem:[%s1 + $0x318] sm:$0xff]
    %v125 = vld [vmem:[%s1 + $0x320] sm:$0xff]
    %v126 = vld [vmem:[%s1 + $0x328] sm:$0xff]
    %v127 = vld [vmem:[%s1 + $0x330] sm:$0xff]
    %v128 = vld [vmem:[%s1 + $0x338] sm:$0xff]
    %v129 = vld [vmem:[%s1 + $0x340] sm:$0xff]
    %v130 = vld [vmem:[%s1 + $0x348] sm:$0xff]
    %v131 = vld [vmem:[%s1 + $0x350] sm:$0xff]
    %v132 = vld [vmem:[%s1 + $0x358] sm:$0xff]
    %v133 = vld [vmem:[%s1 + $0x360] sm:$0xff]
    %v134 = vld [vmem:[%s1 + $0x368] sm:$0xff]
    %v135 = vld [vmem:[%s1 + $0x370] sm:$0xff]
    %v136 = vld [vmem:[%s1 + $0x378] sm:$0xff]
    %v137 = vld [vmem:[%s2] sm:$0xff]
    %v138 = vld [vmem:[%s2 + $0x8] sm:$0xff]
    %v139 = vld [vmem:[%s2 + $0x10] sm:$0xff]
    %v140 = vld [vmem:[%s2 + $0x18] sm:$0xff]
    %v141 = vld [vmem:[%s2 + $0x20] sm:$0xff]
    %v142 = vld [vmem:[%s2 + $0x28] sm:$0xff]
    %v143 = vld [vmem:[%s2 + $0x30] sm:$0xff]
    %v144 = vld [vmem:[%s2 + $0x38] sm:$0xff]
    %v145 = vld [vmem:[%s3] sm:$0xff]
    %v146 = vld [vmem:[%s3 + $0x8] sm:$0xff]
    %v147 = vld [vmem:[%s3 + $0x10] sm:$0xff]
    %v148 = vld [vmem:[%s3 + $0x18] sm:$0xff]
    %v149 = vld [vmem:[%s3 + $0x20] sm:$0xff]
    %v150 = vld [vmem:[%s3 + $0x28] sm:$0xff]
    %v151 = vld [vmem:[%s3 + $0x30] sm:$0xff]
    %v152 = vld [vmem:[%s3 + $0x38] sm:$0xff]
    %vm153 = vcmask 130048
    %v155 = vsel %vm153, %v24, 0
    %v158 = vsel %vm153, %v31, 0
    %v161 = vsel %vm153, %v38, 0
    %v164 = vsel %vm153, %v45, 0
    %v167 = vsel %vm153, %v52, 0
    %v170 = vsel %vm153, %v59, 0
    %v173 = vsel %vm153, %v66, 0
    %v176 = vsel %vm153, %v73, 0
    %v179 = vsel %vm153, %v80, 0
    %v182 = vsel %vm153, %v87, 0
    %v185 = vsel %vm153, %v94, 0
    %v188 = vsel %vm153, %v101, 0
    %v191 = vsel %vm153, %v108, 0
    %v194 = vsel %vm153, %v115, 0
    %v197 = vsel %vm153, %v122, 0
    %v200 = vsel %vm153, %v129, 0
    %v203 = vsel %vm153, %v136, 0
    %205 = vmatpush.xpose.msra.mxu0 %v130
    %206 = vmatpush.xpose.msra.mxu0 %v123
    %207 = vmatpush.xpose.msra.mxu0 %v116
    %208 = vmatpush.xpose.msra.mxu0 %v109
    %209 = vmatpush.xpose.msra.mxu0 %v102
    %210 = vmatpush.xpose.msra.mxu0 %v95
    %211 = vmatpush.xpose.msra.mxu0 %v88
    %212 = vmatpush.xpose.msra.mxu0 %v81
    %213 = vmatpush.xpose.msra.mxu0 %v74
    %214 = vmatpush.xpose.msra.mxu0 %v67
    %215 = vmatpush.xpose.msra.mxu0 %v60
    %216 = vmatpush.xpose.msra.mxu0 %v53
    %217 = vmatpush.xpose.msra.mxu0 %v46
    %218 = vmatpush.xpose.msra.mxu0 %v39
    %219 = vmatpush.xpose.msra.mxu0 %v32
    %220 = vmatpush.xpose.msra.mxu0 %v25
    %221 = vmatmul.f32.gmra.mxu0 %v18
    %v222 = vpop.f32.mrf.mxu0
    %v223 = vadd.f32 0.0, %v222
    %224 = vdwg.mxu0
    %225 = vmatpush.xpose.msra.mxu0 %v131
    %226 = vmatpush.xpose.msra.mxu0 %v124
    %227 = vmatpush.xpose.msra.mxu0 %v117
    %228 = vmatpush.xpose.msra.mxu0 %v110
    %229 = vmatpush.xpose.msra.mxu0 %v103
    %230 = vmatpush.xpose.msra.mxu0 %v96
    %231 = vmatpush.xpose.msra.mxu0 %v89
    %232 = vmatpush.xpose.msra.mxu0 %v82
    %233 = vmatpush.xpose.msra.mxu0 %v75
    %234 = vmatpush.xpose.msra.mxu0 %v68
    %235 = vmatpush.xpose.msra.mxu0 %v61
    %236 = vmatpush.xpose.msra.mxu0 %v54
    %237 = vmatpush.xpose.msra.mxu0 %v47
    %238 = vmatpush.xpose.msra.mxu0 %v40
    %239 = vmatpush.xpose.msra.mxu0 %v33
    %240 = vmatpush.xpose.msra.mxu0 %v26
    %241 = vmatmul.f32.gmra.mxu0 %v19
    %v242 = vpop.f32.mrf.mxu0
    %v243 = vadd.f32 %v223, %v242
    %244 = vdwg.mxu0
    %245 = vmatpush.xpose.msra.mxu0 %v132
    %246 = vmatpush.xpose.msra.mxu0 %v125
    %247 = vmatpush.xpose.msra.mxu0 %v118
    %248 = vmatpush.xpose.msra.mxu0 %v111
    %249 = vmatpush.xpose.msra.mxu0 %v104
    %250 = vmatpush.xpose.msra.mxu0 %v97
    %251 = vmatpush.xpose.msra.mxu0 %v90
    %252 = vmatpush.xpose.msra.mxu0 %v83
    %253 = vmatpush.xpose.msra.mxu0 %v76
    %254 = vmatpush.xpose.msra.mxu0 %v69
    %255 = vmatpush.xpose.msra.mxu0 %v62
    %256 = vmatpush.xpose.msra.mxu0 %v55
    %257 = vmatpush.xpose.msra.mxu0 %v48
    %258 = vmatpush.xpose.msra.mxu0 %v41
    %259 = vmatpush.xpose.msra.mxu0 %v34
    %260 = vmatpush.xpose.msra.mxu0 %v27
    %261 = vmatmul.f32.gmra.mxu0 %v20
    %v262 = vpop.f32.mrf.mxu0
    %v263 = vadd.f32 %v243, %v262
    %264 = vdwg.mxu0
    %265 = vmatpush.xpose.msra.mxu0 %v133
    %266 = vmatpush.xpose.msra.mxu0 %v126
    %267 = vmatpush.xpose.msra.mxu0 %v119
    %268 = vmatpush.xpose.msra.mxu0 %v112
    %269 = vmatpush.xpose.msra.mxu0 %v105
    %270 = vmatpush.xpose.msra.mxu0 %v98
    %271 = vmatpush.xpose.msra.mxu0 %v91
    %272 = vmatpush.xpose.msra.mxu0 %v84
    %273 = vmatpush.xpose.msra.mxu0 %v77
    %274 = vmatpush.xpose.msra.mxu0 %v70
    %275 = vmatpush.xpose.msra.mxu0 %v63
    %276 = vmatpush.xpose.msra.mxu0 %v56
    %277 = vmatpush.xpose.msra.mxu0 %v49
    %278 = vmatpush.xpose.msra.mxu0 %v42
    %279 = vmatpush.xpose.msra.mxu0 %v35
    %280 = vmatpush.xpose.msra.mxu0 %v28
    %281 = vmatmul.f32.gmra.mxu0 %v21
    %v282 = vpop.f32.mrf.mxu0
    %v283 = vadd.f32 %v263, %v282
    %284 = vdwg.mxu0
    %285 = vmatpush.xpose.msra.mxu0 %v134
    %286 = vmatpush.xpose.msra.mxu0 %v127
    %287 = vmatpush.xpose.msra.mxu0 %v120
    %288 = vmatpush.xpose.msra.mxu0 %v113
    %289 = vmatpush.xpose.msra.mxu0 %v106
    %290 = vmatpush.xpose.msra.mxu0 %v99
    %291 = vmatpush.xpose.msra.mxu0 %v92
    %292 = vmatpush.xpose.msra.mxu0 %v85
    %293 = vmatpush.xpose.msra.mxu0 %v78
    %294 = vmatpush.xpose.msra.mxu0 %v71
    %295 = vmatpush.xpose.msra.mxu0 %v64
    %296 = vmatpush.xpose.msra.mxu0 %v57
    %297 = vmatpush.xpose.msra.mxu0 %v50
    %298 = vmatpush.xpose.msra.mxu0 %v43
    %299 = vmatpush.xpose.msra.mxu0 %v36
    %300 = vmatpush.xpose.msra.mxu0 %v29
    %301 = vmatmul.f32.gmra.mxu0 %v22
    %v302 = vpop.f32.mrf.mxu0
    %v303 = vadd.f32 %v283, %v302
    %304 = vdwg.mxu0
    %305 = vmatpush.xpose.msra.mxu0 %v135
    %306 = vmatpush.xpose.msra.mxu0 %v128
    %307 = vmatpush.xpose.msra.mxu0 %v121
    %308 = vmatpush.xpose.msra.mxu0 %v114
    %309 = vmatpush.xpose.msra.mxu0 %v107
    %310 = vmatpush.xpose.msra.mxu0 %v100
    %311 = vmatpush.xpose.msra.mxu0 %v93
    %312 = vmatpush.xpose.msra.mxu0 %v86
    %313 = vmatpush.xpose.msra.mxu0 %v79
    %314 = vmatpush.xpose.msra.mxu0 %v72
    %315 = vmatpush.xpose.msra.mxu0 %v65
    %316 = vmatpush.xpose.msra.mxu0 %v58
    %317 = vmatpush.xpose.msra.mxu0 %v51
    %318 = vmatpush.xpose.msra.mxu0 %v44
    %319 = vmatpush.xpose.msra.mxu0 %v37
    %320 = vmatpush.xpose.msra.mxu0 %v30
    %321 = vmatmul.f32.gmra.mxu0 %v23
    %v322 = vpop.f32.mrf.mxu0
    %v323 = vadd.f32 %v303, %v322
    %324 = vdwg.mxu0
    %325 = vmatpush.xpose.msra.mxu0 %v203
    %326 = vmatpush.xpose.msra.mxu0 %v200
    %327 = vmatpush.xpose.msra.mxu0 %v197
    %328 = vmatpush.xpose.msra.mxu0 %v194
    %329 = vmatpush.xpose.msra.mxu0 %v191
    %330 = vmatpush.xpose.msra.mxu0 %v188
    %331 = vmatpush.xpose.msra.mxu0 %v185
    %332 = vmatpush.xpose.msra.mxu0 %v182
    %333 = vmatpush.xpose.msra.mxu0 %v179
    %334 = vmatpush.xpose.msra.mxu0 %v176
    %335 = vmatpush.xpose.msra.mxu0 %v173
    %336 = vmatpush.xpose.msra.mxu0 %v170
    %337 = vmatpush.xpose.msra.mxu0 %v167
    %338 = vmatpush.xpose.msra.mxu0 %v164
    %339 = vmatpush.xpose.msra.mxu0 %v161
    %340 = vmatpush.xpose.msra.mxu0 %v158
    %341 = vmatmul.f32.gmra.mxu0 %v155
    %v342 = vpop.f32.mrf.mxu0
    %v343 = vadd.f32 %v323, %v342
    %344 = vdwg.mxu0
    %vm345 = vcmp.ge.f32.partialorder %v343, 0.0
    %v346 = vmul.f32 %v343, 0.01
    %v347 = vsel %vm345, %v343, %v346
    %348 = vmatpush.xpose.msra.mxu0 0.0
    %349 = vmatpush.xpose.msra.mxu0 0.0
    %350 = vmatpush.xpose.msra.mxu0 0.0
    %351 = vmatpush.xpose.msra.mxu0 0.0
    %352 = vmatpush.xpose.msra.mxu0 0.0
    %353 = vmatpush.xpose.msra.mxu0 0.0
    %354 = vmatpush.xpose.msra.mxu0 0.0
    %355 = vmatpush.xpose.msra.mxu0 0.0
    %356 = vmatpush.xpose.msra.mxu0 %v144
    %357 = vmatpush.xpose.msra.mxu0 %v143
    %358 = vmatpush.xpose.msra.mxu0 %v142
    %359 = vmatpush.xpose.msra.mxu0 %v141
    %360 = vmatpush.xpose.msra.mxu0 %v140
    %361 = vmatpush.xpose.msra.mxu0 %v139
    %362 = vmatpush.xpose.msra.mxu0 %v138
    %363 = vmatpush.xpose.msra.mxu0 %v137
    %364 = vmatmul.f32.gmra.mxu0 %v347
    %v365 = vpop.f32.mrf.mxu0
    %v366 = vadd.f32 0.0, %v365
    %367 = vdwg.mxu0
    %vm368 = vcmp.ge.f32.partialorder %v366, 0.0
    %v369 = vmul.f32 %v366, 0.01
    %v370 = vsel %vm368, %v366, %v369
    %vm371 = vcmask 523264
    %v373 = vsel %vm371, %v370, 0
    %375 = vmatpush.msra.mxu0 0.0
    %376 = vmatpush.msra.mxu0 0.0
    %377 = vmatpush.msra.mxu0 0.0
    %378 = vmatpush.msra.mxu0 0.0
    %379 = vmatpush.msra.mxu0 0.0
    %380 = vmatpush.msra.mxu0 0.0
    %381 = vmatpush.msra.mxu0 0.0
    %382 = vmatpush.msra.mxu0 0.0
    %383 = vmatpush.msra.mxu0 %v152
    %384 = vmatpush.msra.mxu0 %v151
    %385 = vmatpush.msra.mxu0 %v150
    %386 = vmatpush.msra.mxu0 %v149
    %387 = vmatpush.msra.mxu0 %v148
    %388 = vmatpush.msra.mxu0 %v147
    %389 = vmatpush.msra.mxu0 %v146
    %390 = vmatpush.msra.mxu0 %v145
    %391 = vmatmul.f32.gmra.mxu0 %v373
    %v392 = vpop.f32.mrf.mxu0
    %v393 = vadd.f32 0.0, %v392
    %394 = vdwg.mxu0
    %vm395 = vcmp.ge.f32.partialorder %v393, 0.0
    %v396 = vmul.f32 %v393, 0.01
    %v397 = vsel %vm395, %v393, %v396
    %v399 = vsel %vm371, %v397, 0
    %401 = vmatpush.msra.mxu0 0.0
    %402 = vmatpush.msra.mxu0 0.0
    %403 = vmatpush.msra.mxu0 0.0
    %404 = vmatpush.msra.mxu0 0.0
    %405 = vmatpush.msra.mxu0 0.0
    %406 = vmatpush.msra.mxu0 0.0
    %407 = vmatpush.msra.mxu0 0.0
    %408 = vmatpush.msra.mxu0 0.0
    %409 = vmatpush.msra.mxu0 %v144
    %410 = vmatpush.msra.mxu0 %v143
    %411 = vmatpush.msra.mxu0 %v142
    %412 = vmatpush.msra.mxu0 %v141
    %413 = vmatpush.msra.mxu0 %v140
    %414 = vmatpush.msra.mxu0 %v139
    %415 = vmatpush.msra.mxu0 %v138
    %416 = vmatpush.msra.mxu0 %v137
    %417 = vmatmul.f32.gmra.mxu0 %v399
    %v418 = vpop.f32.mrf.mxu0
    %v419 = vadd.f32 0.0, %v418
    %420 = vdwg.mxu0
    %vm421 = vcmp.ge.f32.partialorder %v419, 0.0
    %v422 = vmul.f32 %v419, 0.01
    %v423 = vsel %vm421, %v419, %v422
    %424 = vmatpush.msra.mxu0 %v130
    %425 = vmatpush.msra.mxu0 %v123
    %426 = vmatpush.msra.mxu0 %v116
    %427 = vmatpush.msra.mxu0 %v109
    %428 = vmatpush.msra.mxu0 %v102
    %429 = vmatpush.msra.mxu0 %v95
    %430 = vmatpush.msra.mxu0 %v88
    %431 = vmatpush.msra.mxu0 %v81
    %432 = vmatpush.msra.mxu0 %v74
    %433 = vmatpush.msra.mxu0 %v67
    %434 = vmatpush.msra.mxu0 %v60
    %435 = vmatpush.msra.mxu0 %v53
    %436 = vmatpush.msra.mxu0 %v46
    %437 = vmatpush.msra.mxu0 %v39
    %438 = vmatpush.msra.mxu0 %v32
    %439 = vmatpush.msra.mxu0 %v25
    %440 = vmatmul.f32.gmra.mxu0 %v423
    %v441 = vpop.f32.mrf.mxu0
    %v442 = vadd.f32 0.0, %v441
    %443 = vdwg.mxu0
    %444 = vmatpush.msra.mxu0 %v131
    %445 = vmatpush.msra.mxu0 %v124
    %446 = vmatpush.msra.mxu0 %v117
    %447 = vmatpush.msra.mxu0 %v110
    %448 = vmatpush.msra.mxu0 %v103
    %449 = vmatpush.msra.mxu0 %v96
    %450 = vmatpush.msra.mxu0 %v89
    %451 = vmatpush.msra.mxu0 %v82
    %452 = vmatpush.msra.mxu0 %v75
    %453 = vmatpush.msra.mxu0 %v68
    %454 = vmatpush.msra.mxu0 %v61
    %455 = vmatpush.msra.mxu0 %v54
    %456 = vmatpush.msra.mxu0 %v47
    %457 = vmatpush.msra.mxu0 %v40
    %458 = vmatpush.msra.mxu0 %v33
    %459 = vmatpush.msra.mxu0 %v26
    %460 = vmatmul.f32.gmra.mxu0 %v423
    %v461 = vpop.f32.mrf.mxu0
    %v462 = vadd.f32 0.0, %v461
    %463 = vdwg.mxu0
    %464 = vmatpush.msra.mxu0 %v132
    %465 = vmatpush.msra.mxu0 %v125
    %466 = vmatpush.msra.mxu0 %v118
    %467 = vmatpush.msra.mxu0 %v111
    %468 = vmatpush.msra.mxu0 %v104
    %469 = vmatpush.msra.mxu0 %v97
    %470 = vmatpush.msra.mxu0 %v90
    %471 = vmatpush.msra.mxu0 %v83
    %472 = vmatpush.msra.mxu0 %v76
    %473 = vmatpush.msra.mxu0 %v69
    %474 = vmatpush.msra.mxu0 %v62
    %475 = vmatpush.msra.mxu0 %v55
    %476 = vmatpush.msra.mxu0 %v48
    %477 = vmatpush.msra.mxu0 %v41
    %478 = vmatpush.msra.mxu0 %v34
    %479 = vmatpush.msra.mxu0 %v27
    %480 = vmatmul.f32.gmra.mxu0 %v423
    %v481 = vpop.f32.mrf.mxu0
    %v482 = vadd.f32 0.0, %v481
    %483 = vdwg.mxu0
    %484 = vmatpush.msra.mxu0 %v133
    %485 = vmatpush.msra.mxu0 %v126
    %486 = vmatpush.msra.mxu0 %v119
    %487 = vmatpush.msra.mxu0 %v112
    %488 = vmatpush.msra.mxu0 %v105
    %489 = vmatpush.msra.mxu0 %v98
    %490 = vmatpush.msra.mxu0 %v91
    %491 = vmatpush.msra.mxu0 %v84
    %492 = vmatpush.msra.mxu0 %v77
    %493 = vmatpush.msra.mxu0 %v70
    %494 = vmatpush.msra.mxu0 %v63
    %495 = vmatpush.msra.mxu0 %v56
    %496 = vmatpush.msra.mxu0 %v49
    %497 = vmatpush.msra.mxu0 %v42
    %498 = vmatpush.msra.mxu0 %v35
    %499 = vmatpush.msra.mxu0 %v28
    %500 = vmatmul.f32.gmra.mxu0 %v423
    %v501 = vpop.f32.mrf.mxu0
    %v502 = vadd.f32 0.0, %v501
    %503 = vdwg.mxu0
    %504 = vmatpush.msra.mxu0 %v134
    %505 = vmatpush.msra.mxu0 %v127
    %506 = vmatpush.msra.mxu0 %v120
    %507 = vmatpush.msra.mxu0 %v113
    %508 = vmatpush.msra.mxu0 %v106
    %509 = vmatpush.msra.mxu0 %v99
    %510 = vmatpush.msra.mxu0 %v92
    %511 = vmatpush.msra.mxu0 %v85
    %512 = vmatpush.msra.mxu0 %v78
    %513 = vmatpush.msra.mxu0 %v71
    %514 = vmatpush.msra.mxu0 %v64
    %515 = vmatpush.msra.mxu0 %v57
    %516 = vmatpush.msra.mxu0 %v50
    %517 = vmatpush.msra.mxu0 %v43
    %518 = vmatpush.msra.mxu0 %v36
    %519 = vmatpush.msra.mxu0 %v29
    %520 = vmatmul.f32.gmra.mxu0 %v423
    %v521 = vpop.f32.mrf.mxu0
    %v522 = vadd.f32 0.0, %v521
    %523 = vdwg.mxu0
    %524 = vmatpush.msra.mxu0 %v135
    %525 = vmatpush.msra.mxu0 %v128
    %526 = vmatpush.msra.mxu0 %v121
    %527 = vmatpush.msra.mxu0 %v114
    %528 = vmatpush.msra.mxu0 %v107
    %529 = vmatpush.msra.mxu0 %v100
    %530 = vmatpush.msra.mxu0 %v93
    %531 = vmatpush.msra.mxu0 %v86
    %532 = vmatpush.msra.mxu0 %v79
    %533 = vmatpush.msra.mxu0 %v72
    %534 = vmatpush.msra.mxu0 %v65
    %535 = vmatpush.msra.mxu0 %v58
    %536 = vmatpush.msra.mxu0 %v51
    %537 = vmatpush.msra.mxu0 %v44
    %538 = vmatpush.msra.mxu0 %v37
    %539 = vmatpush.msra.mxu0 %v30
    %540 = vmatmul.f32.gmra.mxu0 %v423
    %v541 = vpop.f32.mrf.mxu0
    %v542 = vadd.f32 0.0, %v541
    %543 = vdwg.mxu0
    %544 = vmatpush.msra.mxu0 %v136
    %545 = vmatpush.msra.mxu0 %v129
    %546 = vmatpush.msra.mxu0 %v122
    %547 = vmatpush.msra.mxu0 %v115
    %548 = vmatpush.msra.mxu0 %v108
    %549 = vmatpush.msra.mxu0 %v101
    %550 = vmatpush.msra.mxu0 %v94
    %551 = vmatpush.msra.mxu0 %v87
    %552 = vmatpush.msra.mxu0 %v80
    %553 = vmatpush.msra.mxu0 %v73
    %554 = vmatpush.msra.mxu0 %v66
    %555 = vmatpush.msra.mxu0 %v59
    %556 = vmatpush.msra.mxu0 %v52
    %557 = vmatpush.msra.mxu0 %v45
    %558 = vmatpush.msra.mxu0 %v38
    %559 = vmatpush.msra.mxu0 %v31
    %560 = vmatmul.f32.gmra.mxu0 %v423
    %v561 = vpop.f32.mrf.mxu0
    %v562 = vadd.f32 0.0, %v561
    %563 = vdwg.mxu0
    %564 = vst [vmem:[#allocation2] sm:$0xff] %v442
    %565 = vst [vmem:[#allocation2 + $0x8] sm:$0xff] %v462
    %566 = vst [vmem:[#allocation2 + $0x10] sm:$0xff] %v482
    %567 = vst [vmem:[#allocation2 + $0x18] sm:$0xff] %v502
    %568 = vst [vmem:[#allocation2 + $0x20] sm:$0xff] %v522
    %569 = vst [vmem:[#allocation2 + $0x28] sm:$0xff] %v542
    %570 = vst.msk [vmem:[#allocation2 + $0x30] sm:$0xff] %vm153, %v562
    // Predicated region
    $region18: #{tpu_custom_call.1} parent=1 // pred_check
      _
    $region19: #{tpu_custom_call.1} parent=1 // pred_check_branch
      %572 = sbr.rel (0) target = $region21
    $region20: #{tpu_custom_call.1} parent=1 // pred_region
      %574 = vsyncadd [#allocation3], 0
      %s576 = sshll.u32 [#allocation2], 4
      %s577 = int_to_ptr.vmem [resolvable:$true] %s576
      %s578 = sshll.u32 %s4, 4
      %s579 = int_to_ptr.hbm [resolvable:$true] %s578
      %581 = dma.vmem_to_hbm [thread:$0]  %s577, 896, %s579, [#allocation3]
    $region21: #{tpu_custom_call.1} parent=1 // pred_fallthru
      _
    // Predicated region
    $region22: #{tpu_custom_call.1} parent=1 // pred_check
      _
    $region23: #{tpu_custom_call.1} parent=1 // pred_check_branch
      %583 = sbr.rel (0) target = $region25
    $region24: #{tpu_custom_call.1} parent=1 // pred_region
      %585 = dma.done [#allocation3], 896
    $region25: #{tpu_custom_call.1} parent=1 // pred_fallthru
      _
    %586 = vsyncpa [#allocation3], 1

</llo_original>
